<compile_context>
chip_gen: v6e
topology: v6e:2x2x1
jax: 0.10.0
libtpu: 0.0.40
codegen_flags: <defaults>
</compile_context>

<pallas_src>
import functools

import numpy as np
import jax
import jax.numpy as jnp
from jax.experimental import pallas as pl
from jax.experimental.pallas import tpu as pltpu

_LANE = 128


def _decode_kernel(anch_ref, grid_ref, pred_ref, dec_ref, *, head):
    """Decode one (attrs, TILE_HW) slab for a single (batch, anchor, hw-tile) step.

    anch_ref : SMEM (A, 2) scaled anchors (w, h).
    grid_ref : VMEM (1, TILE_HW) grid offsets for this HW tile.
    pred_ref : VMEM (attrs, TILE_HW) raw predictions (native dtype).
    dec_ref  : VMEM (attrs, TILE_HW) decoded output.
    """
    attrs = pred_ref.shape[0]
    a = pl.program_id(1)

    # Per-attr-row constants on a single (head, 1) column — negligible VALU cost.
    row = jax.lax.broadcasted_iota(jnp.int32, (head, 1), 0)
    aw = anch_ref[a, 0]
    ah = anch_ref[a, 1]
    anch = jnp.where(row == 2, aw, jnp.where(row == 3, ah, 1.0))   # (head, 1)
    is_wh = (row == 2) | (row == 3)                                # (head, 1)
    xym = jnp.where(row < 2, 1.0, 0.0)                             # (head, 1)

    col = grid_ref[...]                                            # (1, TILE_HW)

    # Head rows (x, y, w, h, conf, first classes): exp / grid / select path.
    p = pred_ref[:head, :].astype(jnp.float32)
    sig = 1.0 / (1.0 + jnp.exp(-p))
    wh = jnp.exp(p) * anch          # exp may be inf on non-w/h rows; selected away below
    base = sig + xym * col
    dec_ref[:head, :] = jnp.where(is_wh, wh, base).astype(dec_ref.dtype)

    # Tail rows (remaining class logits): plain sigmoid, no exp / iota / select.
    if attrs > head:
        pt = pred_ref[head:, :].astype(jnp.float32)
        dec_ref[head:, :] = (1.0 / (1.0 + jnp.exp(-pt))).astype(dec_ref.dtype)


def decode_box_forward(inp, anchors, num_classes, img_size, *, tile_hw=1024,
                       out_dtype=None):
    B, C, H, W = inp.shape
    A = len(anchors)
    attrs = 5 + num_classes
    assert C == A * attrs, "channel dim must be num_anchors * (5 + num_classes)"
    # The torch grid construction (repeat + view, no transpose) only works for
    # square feature maps.
    assert H == W, "DecodeBox grid construction assumes a square feature map"
    if out_dtype is None:
        out_dtype = inp.dtype
    HW = H * W

    # Pad HW so DMAs are full-lane and the output store is an unmasked vst.
    hw_pad = ((HW + _LANE - 1) // _LANE) * _LANE
    tile = min(int(tile_hw), hw_pad)
    tile = ((tile + _LANE - 1) // _LANE) * _LANE
    hw_pad = ((hw_pad + tile - 1) // tile) * tile
    n_hw_tiles = hw_pad // tile

    stride_h = img_size[1] / H
    stride_w = img_size[0] / W
    scaled_anchors = jnp.array(
        [(aw / stride_w, ah / stride_h) for (aw, ah) in anchors], dtype=jnp.float32
    )  # (A, 2) -> SMEM

    pred = inp.reshape(B, A, attrs, HW)           # native dtype; cast on-chip
    if hw_pad != HW:
        pred = jnp.pad(pred, ((0, 0), (0, 0), (0, 0), (0, hw_pad - HW)))

    # Torch quirk preserved: grid_x AND grid_y both equal the COLUMN index
    # (the reference torch code never transposes grid_y; valid for square maps).
    # TODO(synk): if upstream fixes grid_y with .t(), pass a second grid row (l // W)
    # and add it on attr row 1 instead.
    grid_row = (jnp.arange(hw_pad, dtype=jnp.float32) % W).reshape(1, hw_pad)

    head = min(8, attrs)
    in_item = np.dtype(inp.dtype).itemsize
    out_item = np.dtype(out_dtype).itemsize
    n_elem = B * A * attrs * hw_pad
    cost = pl.CostEstimate(
        flops=int(B * A * hw_pad * (5 * head + (attrs - head))),
        transcendentals=int(B * A * hw_pad * (3 * head + 2 * (attrs - head))),
        bytes_accessed=int(n_elem * (in_item + out_item) + hw_pad * 4 + A * 2 * 4),
    )

    decoded = pl.pallas_call(
        functools.partial(_decode_kernel, head=head),
        out_shape=jax.ShapeDtypeStruct((B, A, attrs, hw_pad), out_dtype),
        grid=(B, A, n_hw_tiles),
        in_specs=[
            pl.BlockSpec(memory_space=pltpu.MemorySpace.SMEM),                 # scaled anchors (A, 2)
            pl.BlockSpec((1, tile), lambda b, a, t: (0, t)),                   # grid row tile
            pl.BlockSpec((None, None, attrs, tile), lambda b, a, t: (b, a, 0, t)),  # predictions
        ],
        out_specs=pl.BlockSpec((None, None, attrs, tile), lambda b, a, t: (b, a, 0, t)),
        compiler_params=pltpu.CompilerParams(
            dimension_semantics=("parallel", "parallel", "parallel"),
            vmem_limit_bytes=32 * 1024 * 1024,
        ),
        cost_estimate=cost,
    )(scaled_anchors, grid_row, pred)

    if hw_pad != HW:
        decoded = decoded[:, :, :, :HW]

    # Module semantics: forward returns `input` unchanged (no kernel copy).
    return inp, decoded


def _decode_reference(inp, anchors, num_classes, img_size):
    """Pure-JAX reference of the decode math, same layout as the kernel output."""
    B, C, H, W = inp.shape
    A = len(anchors)
    attrs = 5 + num_classes
    HW = H * W
    stride_h = img_size[1] / H
    stride_w = img_size[0] / W
    scaled = jnp.array(
        [(aw / stride_w, ah / stride_h) for (aw, ah) in anchors], dtype=jnp.float32
    )
    sigmoid = lambda v: 1.0 / (1.0 + jnp.exp(-v))
    p = inp.reshape(B, A, attrs, HW).astype(jnp.float32)
    gx = jnp.tile(jnp.arange(W, dtype=jnp.float32)[None, :], (H, 1)).reshape(HW)
    gy = jnp.tile(jnp.arange(H, dtype=jnp.float32)[None, :], (H, 1)).reshape(HW)
    bx = sigmoid(p[:, :, 0, :]) + gx[None, None, :]
    by = sigmoid(p[:, :, 1, :]) + gy[None, None, :]
    bw = jnp.exp(p[:, :, 2, :]) * scaled[None, :, 0, None]
    bh = jnp.exp(p[:, :, 3, :]) * scaled[None, :, 1, None]
    conf = sigmoid(p[:, :, 4, :])
    cls = sigmoid(p[:, :, 5:, :])
    boxes = jnp.stack([bx, by, bw, bh, conf], axis=2)
    return jnp.concatenate([boxes, cls], axis=2)


if __name__ == "__main__":
    key = jax.random.PRNGKey(0)
    B, H, W = 2, 16, 16
    num_classes = 3
    anchors = [(10.0, 13.0), (16.0, 30.0), (33.0, 23.0)]  # deterministic, in-script
    A = len(anchors)
    attrs = 5 + num_classes
    img_size = (64, 64)

    x = jax.random.normal(key, (B, A * attrs, H, W), dtype=jnp.float32)

    out, decoded = decode_box_forward(x, anchors, num_classes, img_size)
    jax.block_until_ready((out, decoded))

    # Module return value must be the input, unchanged.
    assert out.shape == x.shape and out.dtype == x.dtype
    assert jnp.allclose(out, x), "passthrough mismatch"
    # Check the in-kernel decode math against the pure-JAX reference.
    ref = _decode_reference(x, anchors, num_classes, img_size)
    assert decoded.shape == ref.shape
    assert jnp.allclose(decoded, ref, atol=1e-5, rtol=1e-5), "decode mismatch"

    print("KERNEL_OK")
</pallas_src>

<mosaic_0001>
module attributes {stable_mosaic.version = 11 : i64} {
  func.func @_decode_kernel(%arg0: i32, %arg1: i32, %arg2: i32, %arg3: memref<3x2xf32, #tpu.memory_space<smem>>, %arg4: memref<1x256xf32, #tpu.memory_space<vmem>>, %arg5: memref<1x1x8x256xf32, #tpu.memory_space<vmem>>, %arg6: memref<1x1x8x256xf32, #tpu.memory_space<vmem>>) attributes {dimension_semantics = [#tpu.dimension_semantics<parallel>, #tpu.dimension_semantics<parallel>, #tpu.dimension_semantics<parallel>], iteration_bounds = array<i64: 2, 3, 1>, scalar_prefetch = 0 : i64, scratch_operands = 0 : i64, tpu.core_type = #tpu.core_type<tc>, window_params = [{transform_indices = @transform_0, window_bounds = array<i64: 3, 2>}, {transform_indices = @transform_1, window_bounds = array<i64: 1, 256>}, {transform_indices = @transform_2, window_bounds = array<i64: 1, 1, 8, 256>}, {transform_indices = @transform_3, window_bounds = array<i64: 1, 1, 8, 256>}]} {
    %0 = tpu.iota {dimensions = array<i32: 0>} : vector<8x1xi32>
    %1 = arith.index_cast %arg1 : i32 to index
    %c0 = arith.constant 0 : index
    %2 = memref.load %arg3[%1, %c0] : memref<3x2xf32, #tpu.memory_space<smem>>
    %3 = arith.index_cast %arg1 : i32 to index
    %c1 = arith.constant 1 : index
    %4 = memref.load %arg3[%3, %c1] : memref<3x2xf32, #tpu.memory_space<smem>>
    %c2_i32 = arith.constant 2 : i32
    %5 = vector.broadcast %c2_i32 : i32 to vector<8x1xi32>
    %6 = arith.cmpi eq, %0, %5 : vector<8x1xi32>
    %c3_i32 = arith.constant 3 : i32
    %7 = vector.broadcast %c3_i32 : i32 to vector<8x1xi32>
    %8 = arith.cmpi eq, %0, %7 : vector<8x1xi32>
    %cst = arith.constant 1.000000e+00 : f32
    %9 = vector.broadcast %4 : f32 to vector<8x1xf32>
    %10 = vector.broadcast %cst : f32 to vector<8x1xf32>
    %11 = arith.select %8, %9, %10 : vector<8x1xi1>, vector<8x1xf32>
    %12 = vector.broadcast %2 : f32 to vector<8x1xf32>
    %13 = arith.select %6, %12, %11 : vector<8x1xi1>, vector<8x1xf32>
    %c2_i32_0 = arith.constant 2 : i32
    %14 = vector.broadcast %c2_i32_0 : i32 to vector<8x1xi32>
    %15 = arith.cmpi eq, %0, %14 : vector<8x1xi32>
    %c3_i32_1 = arith.constant 3 : i32
    %16 = vector.broadcast %c3_i32_1 : i32 to vector<8x1xi32>
    %17 = arith.cmpi eq, %0, %16 : vector<8x1xi32>
    %18 = arith.ori %15, %17 : vector<8x1xi1>
    %c2_i32_2 = arith.constant 2 : i32
    %19 = vector.broadcast %c2_i32_2 : i32 to vector<8x1xi32>
    %20 = arith.cmpi slt, %0, %19 : vector<8x1xi32>
    %cst_3 = arith.constant 1.000000e+00 : f32
    %cst_4 = arith.constant 0.000000e+00 : f32
    %21 = vector.broadcast %cst_3 : f32 to vector<8x1xf32>
    %22 = vector.broadcast %cst_4 : f32 to vector<8x1xf32>
    %23 = arith.select %20, %21, %22 : vector<8x1xi1>, vector<8x1xf32>
    %c0_5 = arith.constant 0 : index
    %c0_6 = arith.constant 0 : index
    %24 = vector.load %arg4[%c0_5, %c0_6] : memref<1x256xf32, #tpu.memory_space<vmem>>, vector<1x256xf32>
    %c0_7 = arith.constant 0 : index
    %c0_8 = arith.constant 0 : index
    %c0_9 = arith.constant 0 : index
    %c0_10 = arith.constant 0 : index
    %25 = vector.load %arg5[%c0_7, %c0_8, %c0_9, %c0_10] : memref<1x1x8x256xf32, #tpu.memory_space<vmem>>, vector<1x1x8x256xf32>
    %26 = vector.shape_cast %25 : vector<1x1x8x256xf32> to vector<8x256xf32>
    %cst_11 = arith.constant 0.000000e+00 : f32
    %27 = vector.broadcast %cst_11 : f32 to vector<8x256xf32>
    %28 = arith.subf %27, %26 : vector<8x256xf32>
    %29 = math.exp %28 : vector<8x256xf32>
    %cst_12 = arith.constant 1.000000e+00 : f32
    %30 = vector.broadcast %cst_12 : f32 to vector<8x256xf32>
    %31 = arith.addf %30, %29 : vector<8x256xf32>
    %cst_13 = arith.constant 1.000000e+00 : f32
    %32 = vector.broadcast %cst_13 : f32 to vector<8x256xf32>
    %33 = arith.divf %32, %31 : vector<8x256xf32>
    %34 = math.exp %26 : vector<8x256xf32>
    %35 = vector.broadcast %13 : vector<8x1xf32> to vector<8x256xf32>
    %36 = arith.mulf %34, %35 : vector<8x256xf32>
    %37 = vector.broadcast %23 : vector<8x1xf32> to vector<8x256xf32>
    %38 = vector.broadcast %24 : vector<1x256xf32> to vector<8x256xf32>
    %39 = arith.mulf %37, %38 : vector<8x256xf32>
    %40 = arith.addf %33, %39 : vector<8x256xf32>
    %41 = vector.shape_cast %18 : vector<8x1xi1> to vector<8x1xi1>
    %42 = vector.broadcast %41 : vector<8x1xi1> to vector<8x256xi1>
    %43 = arith.select %42, %36, %40 : vector<8x256xi1>, vector<8x256xf32>
    %c0_14 = arith.constant 0 : index
    %c0_15 = arith.constant 0 : index
    %c0_16 = arith.constant 0 : index
    %c0_17 = arith.constant 0 : index
    %44 = vector.load %arg6[%c0_14, %c0_15, %c0_16, %c0_17] : memref<1x1x8x256xf32, #tpu.memory_space<vmem>>, vector<1x1x8x256xf32>
    %45 = vector.shape_cast %44 : vector<1x1x8x256xf32> to vector<8x256xf32>
    %46 = vector.shape_cast %43 : vector<8x256xf32> to vector<1x1x8x256xf32>
    tpu.vector_store %arg6[%c0_14, %c0_15, %c0_16, %c0_17], %46 {strides = array<i32>} : memref<1x1x8x256xf32, #tpu.memory_space<vmem>>, vector<1x1x8x256xf32>,
    return
  }
  func.func @transform_0(%arg0: i32, %arg1: i32, %arg2: i32) -> (i32, i32) {
    %c0_i32 = arith.constant 0 : i32
    %c0_i32_0 = arith.constant 0 : i32
    %c0_i32_1 = arith.constant 0 : i32
    return %c0_i32, %c0_i32_0 : i32, i32
  }
  func.func @transform_1(%arg0: i32, %arg1: i32, %arg2: i32) -> (i32, i32) {
    %c0_i32 = arith.constant 0 : i32
    %c0_i32_0 = arith.constant 0 : i32
    return %c0_i32, %arg2 : i32, i32
  }
  func.func @transform_2(%arg0: i32, %arg1: i32, %arg2: i32) -> (i32, i32, i32, i32) {
    %c0_i32 = arith.constant 0 : i32
    %c0_i32_0 = arith.constant 0 : i32
    return %arg0, %arg1, %c0_i32, %arg2 : i32, i32, i32, i32
  }
  func.func @transform_3(%arg0: i32, %arg1: i32, %arg2: i32) -> (i32, i32, i32, i32) {
    %c0_i32 = arith.constant 0 : i32
    %c0_i32_0 = arith.constant 0 : i32
    return %arg0, %arg1, %c0_i32, %arg2 : i32, i32, i32, i32
  }
}

</mosaic_0001>

<llo_original>
// kernel: tpu_custom_call.1
$region0: #{tpu_custom_call.1}
  #allocation0 [shape = 'u32[]', space=smem, size = 0x4, offset = 0x4, fixed_abs, tag = 'smem constant byte address 0x4 - core index']
  #allocation1 [shape = 'u32[144,128]{1,0:T(1,128)}', space=vmem, size = 0x12000, scoped, tag = 'internal scratch']
  %s0 = inlined_call_operand.vmem [shape: f32[3,2], index: 0, kind: input, shape index: {}]
  %s1 = inlined_call_operand.vmem [shape: f32[1,256], index: 1, kind: input, shape index: {}]
  %s2 = inlined_call_operand.hbm [shape: f32[2,3,8,256], index: 2, kind: input, shape index: {}]
  %s3 = inlined_call_operand.hbm [shape: f32[2,3,8,256], index: 3, kind: output, shape index: {}]
  %s4 = sld [smem:[#allocation0]]
  $region53: #{tpu_custom_call.1} parent=0
    _
  %s6 = ssub.s32 1, %s4
  %s7 = scalar_select 0, %s6, %s4
  $region1: #{tpu_custom_call.1} parent=0
    #allocation2 [shape = 'u8[2048]{0}', space=smem, size = 0x800, scoped, tag = 'input window, operand 0, single buffered']
    #allocation3 [shape = 's32[2]{0}', space=sflag, size = 0x8, scoped, tag = 'scoped memory for tpu_custom_call.1']
    #allocation4 [shape = 's32[2]{0}', space=sflag, size = 0x8, scoped, tag = 'scoped memory for tpu_custom_call.1']
    #allocation5 [shape = 's32[2]{0}', space=sflag, size = 0x8, scoped, tag = 'scoped memory for tpu_custom_call.1']
    #allocation6 [shape = 'u8[16384]{0}', space=vmem, size = 0x4000, scoped, tag = 'input window, operand 2']
    #allocation7 [shape = 'u8[16384]{0}', space=vmem, size = 0x4000, scoped, tag = 'output window, operand 0']
    %8 = vsyncpa [#allocation5], 0
    %9 = vsyncpa [#allocation3], 0
    %s10 = scalar_lea.sflag [#allocation3], 1
    %11 = vsyncpa %s10, 0
    %12 = vsyncpa [#allocation4], 0
    %s13 = scalar_lea.sflag [#allocation4], 1
    %14 = vsyncpa %s13, 0
    loop: start=0, step=1, limit=8
    $region2: #{tpu_custom_call.1} parent=1 // loop_pre_header
      _
    $region3: #{tpu_custom_call.1} parent=1 // loop_header
      %s16 = sphi 0, %s20
      %p17 = scmp.ge.s32.totalorder %s16, 8
      %s23 = sphi 0, %s42
      %s24 = sphi 0, %s38
      %s25 = sphi 0, %s34
      %s26 = sphi 0, %s23
      %s27 = sphi 0, %s24
      %s28 = sphi 0, %s25
      %s29 = sphi 0, %s26
      %s30 = sphi 0, %s27
      %s31 = sphi 0, %s28
      %s43 = sphi 0, %s43
      %s45 = sphi 0, %s43
      %s46 = sphi 0, %s45
      %s60 = sphi 0, %s46
      %s66 = sphi 0, %s68
      %s69 = sphi 0, %s66
      %s70 = sphi 0, %s69
      %s86 = sphi 0, %s70
      %s96 = sphi 0, %s98
      %s99 = sphi 0, %s96
      %s100 = sphi 0, %s99
      %s116 = sphi 0, %s100
      %s126 = sphi 0, %s128
      %s129 = sphi 0, %s126
      %s130 = sphi 0, %s129
      %s146 = sphi 0, %s130
    $region4: #{tpu_custom_call.1} parent=1 // loop_header_branch
      %19 = sbr.rel (%p17) target = $region8
    $region5: #{tpu_custom_call.1} parent=1 // loop_body
      %s21 = ssub.s32 %s16, 1
      %s22 = ssub.s32 %s16, 2
      %s32 = sadd.s32 1, %s25
      %p33 = scmp.ge.s32.totalorder %s32, 1
      %s34 = scalar_select %p33, 0, %s32
      %s35 = sadd.s32 1, %s24
      %s36 = scalar_select %p33, %s35, %s24
      %p37 = scmp.ge.s32.totalorder %s36, 3
      %s38 = scalar_select %p37, 0, %s36
      %s39 = sadd.s32 1, %s23
      %s40 = scalar_select %p37, %s39, %s23
      %p41 = scmp.ge.s32.totalorder %s40, 2
      %s42 = scalar_select %p41, 0, %s40
      %s44 = sadd.s32 %s43, 1
      %p47 = scmp.eq.s32.totalorder %s16, 5
      %p48 = scmp.ne.s32.totalorder %s43, %s45
      %p49 = scmp.eq.s32.totalorder %s16, 0
      %p50 = por %p48, %p49
      %p51 = scmp.ne.s32.totalorder %s43, %s45
      %p52 = scmp.eq.s32.totalorder %s21, 5
      %p53 = por %p51, %p52
      %p54 = scmp.ne.s32.totalorder %s45, %s46
      %p55 = scmp.eq.s32.totalorder %s21, 0
      %p56 = por %p54, %p55
      %p57 = scmp.ne.s32.totalorder %s45, %s46
      %p58 = scmp.eq.s32.totalorder %s22, 5
      %p59 = por %p57, %p58
      %p61 = scmp.ne.s32.totalorder %s46, %s60
      %p62 = scmp.eq.s32.totalorder %s22, 0
      %p63 = por %p61, %p62
      %s64 = ssub.s32 %s25, %s34
      %p65 = scmp.eq.s32.totalorder %s64, 0
      %s67 = sadd.s32 %s66, 1
      %s68 = scalar_select %p65, %s66, %s67
      %p71 = pneg %p65
      %p72 = scmp.eq.s32.totalorder %s16, 5
      %p73 = por %p71, %p72
      %p74 = scmp.ne.s32.totalorder %s66, %s69
      %p75 = scmp.eq.s32.totalorder %s16, 0
      %p76 = por %p74, %p75
      %p77 = scmp.ne.s32.totalorder %s66, %s69
      %p78 = scmp.eq.s32.totalorder %s21, 5
      %p79 = por %p77, %p78
      %p80 = scmp.ne.s32.totalorder %s69, %s70
      %p81 = scmp.eq.s32.totalorder %s21, 0
      %p82 = por %p80, %p81
      %p83 = scmp.ne.s32.totalorder %s69, %s70
      %p84 = scmp.eq.s32.totalorder %s22, 5
      %p85 = por %p83, %p84
      %p87 = scmp.ne.s32.totalorder %s70, %s86
      %p88 = scmp.eq.s32.totalorder %s22, 0
      %p89 = por %p87, %p88
      %s90 = ssub.s32 %s23, %s42
      %s91 = ssub.s32 %s24, %s38
      %s92 = sor.u32 %s90, %s91
      %s93 = ssub.s32 %s25, %s34
      %s94 = sor.u32 %s92, %s93
      %p95 = scmp.eq.s32.totalorder %s94, 0
      %s97 = sadd.s32 %s96, 1
      %s98 = scalar_select %p95, %s96, %s97
      %p101 = pneg %p95
      %p102 = scmp.eq.s32.totalorder %s16, 5
      %p103 = por %p101, %p102
      %p104 = scmp.ne.s32.totalorder %s96, %s99
      %p105 = scmp.eq.s32.totalorder %s16, 0
      %p106 = por %p104, %p105
      %p107 = scmp.ne.s32.totalorder %s96, %s99
      %p108 = scmp.eq.s32.totalorder %s21, 5
      %p109 = por %p107, %p108
      %p110 = scmp.ne.s32.totalorder %s99, %s100
      %p111 = scmp.eq.s32.totalorder %s21, 0
      %p112 = por %p110, %p111
      %p113 = scmp.ne.s32.totalorder %s99, %s100
      %p114 = scmp.eq.s32.totalorder %s22, 5
      %p115 = por %p113, %p114
      %p117 = scmp.ne.s32.totalorder %s100, %s116
      %p118 = scmp.eq.s32.totalorder %s22, 0
      %p119 = por %p117, %p118
      %s120 = ssub.s32 %s23, %s42
      %s121 = ssub.s32 %s24, %s38
      %s122 = sor.u32 %s120, %s121
      %s123 = ssub.s32 %s25, %s34
      %s124 = sor.u32 %s122, %s123
      %p125 = scmp.eq.s32.totalorder %s124, 0
      %s127 = sadd.s32 %s126, 1
      %s128 = scalar_select %p125, %s126, %s127
      %p131 = pneg %p125
      %p132 = scmp.eq.s32.totalorder %s16, 5
      %p133 = por %p131, %p132
      %p134 = scmp.ne.s32.totalorder %s126, %s129
      %p135 = scmp.eq.s32.totalorder %s16, 0
      %p136 = por %p134, %p135
      %p137 = scmp.ne.s32.totalorder %s126, %s129
      %p138 = scmp.eq.s32.totalorder %s21, 5
      %p139 = por %p137, %p138
      %p140 = scmp.ne.s32.totalorder %s129, %s130
      %p141 = scmp.eq.s32.totalorder %s21, 0
      %p142 = por %p140, %p141
      %p143 = scmp.ne.s32.totalorder %s129, %s130
      %p144 = scmp.eq.s32.totalorder %s22, 5
      %p145 = por %p143, %p144
      %p147 = scmp.ne.s32.totalorder %s130, %s146
      %p148 = scmp.eq.s32.totalorder %s22, 0
      %p149 = por %p147, %p148
      %p150 = scmp.le.s32.totalorder 1, %s16
      %p151 = scmp.lt.s32.totalorder %s16, 7
      %p152 = pnand %p150, %p151
      %p153 = pneg %p152
      // Predicated region
      $region9: #{tpu_custom_call.1} parent=5 // pred_check
        _
      $region10: #{tpu_custom_call.1} parent=5 // pred_check_branch
        %155 = sbr.rel (%p152) target = $region12
      $region11: #{tpu_custom_call.1} parent=5 // pred_region
        %s156 = ssub.s32 %s16, 1
        // Predicated region
        $region13: #{tpu_custom_call.1} parent=11 // pred_check
          %p157 = pneg %p56
        $region14: #{tpu_custom_call.1} parent=11 // pred_check_branch
          %159 = sbr.rel (%p157) target = $region16
        $region15: #{tpu_custom_call.1} parent=11 // pred_region
          %s161 = ssub.s32 64, 64
          %162 = vsyncadd [#allocation5], %s161
          %s164 = sshll.u32 %s0, 4
          %s165 = int_to_ptr.vmem [resolvable:$true] %s164
          %167 = dma.vmem_to_smem %s165, 64, [#allocation2], [#allocation5]
        $region16: #{tpu_custom_call.1} parent=11 // pred_fallthru
          _
        // Predicated region
        $region17: #{tpu_custom_call.1} parent=11 // pred_check
          %p168 = pneg %p82
        $region18: #{tpu_custom_call.1} parent=11 // pred_check_branch
          %170 = sbr.rel (%p168) target = $region20
        $region19: #{tpu_custom_call.1} parent=11 // pred_region
          %s171 = smul.u32 2, %s28
          %p172 = scmp.lt.s32.totalorder %s171, 1
          %s173 = scalar_select %p172, %s171, 1
          %s174 = scalar_lea.vmem %s1, %s173
          %s175 = smul.u32 2, %s28
        $region20: #{tpu_custom_call.1} parent=11 // pred_fallthru
          _
      $region12: #{tpu_custom_call.1} parent=5 // pred_fallthru
        _
      %p176 = scmp.lt.s32.totalorder %s16, 6
      // Predicated region
      $region21: #{tpu_custom_call.1} parent=5 // pred_check
        %p177 = pneg %p176
      $region22: #{tpu_custom_call.1} parent=5 // pred_check_branch
        %179 = sbr.rel (%p177) target = $region24
      $region23: #{tpu_custom_call.1} parent=5 // pred_region
        // Predicated region
        $region25: #{tpu_custom_call.1} parent=23 // pred_check
          %p180 = pneg %p106
        $region26: #{tpu_custom_call.1} parent=23 // pred_check_branch
          %182 = sbr.rel (%p180) target = $region28
        $region27: #{tpu_custom_call.1} parent=23 // pred_region
          %s183 = sand.u32 %s96, 1
          %s184 = scalar_lea.sflag [#allocation3], %s183
          %s185 = sand.u32 %s96, 1
          %s186 = smul.addr %s185, 16
          %s187 = scalar_lea.vmem [#allocation6], %s186
          %s188 = smul.u32 2, %s25
          %s190 = ssub.s32 256, 256
          %191 = vsyncadd %s184, %s190
          %s192 = smul.addr %s24, 2
          %s193 = sadd.s32 %s188, %s192
          %s194 = smul.addr %s23, 6
          %s195 = sadd.s32 %s193, %s194
          %s196 = smul.addr %s195, 128
          %s197 = scalar_lea.hbm %s2, %s196
          %s199 = sshll.u32 %s187, 4
          %s200 = int_to_ptr.vmem [resolvable:$true] %s199
          %202 = dma.hbm_to_vmem [thread:$0]  %s197, 256, %s200, %s184
        $region28: #{tpu_custom_call.1} parent=23 // pred_fallthru
          _
      $region24: #{tpu_custom_call.1} parent=5 // pred_fallthru
        _
      %p203 = scmp.le.s32.totalorder 1, %s16
      %p204 = scmp.lt.s32.totalorder %s16, 7
      %p205 = pnand %p203, %p204
      %p206 = pneg %p205
      // Predicated region
      $region29: #{tpu_custom_call.1} parent=5 // pred_check
        _
      $region30: #{tpu_custom_call.1} parent=5 // pred_check_branch
        %208 = sbr.rel (%p205) target = $region32
      $region31: #{tpu_custom_call.1} parent=5 // pred_region
        %s209 = ssub.s32 %s16, 1
        // Predicated region
        $region33: #{tpu_custom_call.1} parent=31 // pred_check
          %p210 = pneg %p56
        $region34: #{tpu_custom_call.1} parent=31 // pred_check_branch
          %212 = sbr.rel (%p210) target = $region36
        $region35: #{tpu_custom_call.1} parent=31 // pred_region
          %213 = dma.done [#allocation5], 64
        $region36: #{tpu_custom_call.1} parent=31 // pred_fallthru
          _
        %s214 = sand.u32 %s99, 1
        %s215 = scalar_lea.sflag [#allocation3], %s214
        %s216 = sand.u32 %s99, 1
        %s217 = smul.addr %s216, 16
        %s218 = scalar_lea.vmem [#allocation6], %s217
        // Predicated region
        $region37: #{tpu_custom_call.1} parent=31 // pred_check
          %p219 = pneg %p112
        $region38: #{tpu_custom_call.1} parent=31 // pred_check_branch
          %221 = sbr.rel (%p219) target = $region40
        $region39: #{tpu_custom_call.1} parent=31 // pred_region
          %222 = dma.done %s215, 256
        $region40: #{tpu_custom_call.1} parent=31 // pred_fallthru
          _
        %223 = sfence
        %p224 = pneg %p56
        %p225 = pneg %p53
        %s226 = smul.u32 2, %s28
        %p227 = scmp.lt.s32.totalorder %s226, 1
        %s228 = scalar_select %p227, %s226, 1
        %s229 = scalar_lea.vmem %s1, %s228
        %p230 = pneg %p82
        %p231 = pneg %p79
        %s232 = sand.u32 %s99, 1
        %s233 = scalar_lea.sflag [#allocation3], %s232
        %s234 = sand.u32 %s99, 1
        %s235 = smul.addr %s234, 16
        %s236 = scalar_lea.vmem [#allocation6], %s235
        %p237 = pneg %p112
        %p238 = pneg %p109
        %p239 = pneg %p142
        %p240 = pneg %p139
        %s241 = sand.u32 %s129, 1
        %s242 = scalar_lea.sflag [#allocation4], %s241
        %s243 = sand.u32 %s129, 1
        %s244 = smul.addr %s243, 16
        %s245 = scalar_lea.vmem [#allocation7], %s244
        %s246 = smul.u32 2, %s28
        %p247 = scmp.lt.s32.totalorder %s246, 1
        %s248 = scalar_select %p247, %s246, 1
        %s249 = scalar_lea.vmem %s1, %s248
        %s250 = smul.u32 2, %s28
        %s251 = smul.u32 2, %s28
        %s252 = smul.u32 2, %s28
        %v253 = vlaneseq
        %v254 = vshrl.u32 %v253, 7
        %s255 = smul.u32 %s27, 128
        %s256 = sld [smem:[#allocation2 + %s255]]
        %s257 = sadd.s32 %s255, 1
        %s258 = sld [smem:[#allocation2 + %s257]]
        %vm259 = vcmp.eq.s32.totalorder %v254, 2
        %vm260 = vcmp.eq.s32.totalorder %v254, 3
        %v261 = vstv %s258
        %v262 = vsel %vm260, %v261, 1.0
        %v263 = vstv %s256
        %v264 = vsel %vm259, %v263, %v262
        %vm265 = vmor %vm259, %vm260
        %vm266 = vcmp.lt.s32.totalorder %v254, 2
        %v267 = vsel %vm266, 1.0, 0.0
        %v268 = vld [vmem:[%s249] sm:$0x3]
        %v269 = vld [vmem:[%s218] sm:$0xff]
        %v270 = vld [vmem:[%s218 + $0x8] sm:$0xff]
        %v271 = vsub.f32 0.0, %v269
        %v272 = vsub.f32 0.0, %v270
        %v273 = vmul.f32 %v271, 1.442695
        %v274 = vpow.pop %v273
        %v275 = vmul.f32 %v272, 1.442695
        %v276 = vpow.pop %v275
        %v277 = vadd.f32 %v274, 1.0
        %v278 = vadd.f32 %v276, 1.0
        %v279 = vrcp.pop %v277
        %v280 = vmul.f32 1.0, %v279
        %v281 = vrcp.pop %v278
        %v282 = vmul.f32 1.0, %v281
        %v283 = vmul.f32 %v269, 1.442695
        %v284 = vpow.pop %v283
        %v285 = vmul.f32 %v270, 1.442695
        %v286 = vpow.pop %v285
        %v287 = vmul.f32 %v284, %v264
        %v288 = vmul.f32 %v286, %v264
        %v290 = vlaneseq
        %v291 = vshrl.u32 %v290, 7
        %v292 = vsub.s32 0, %v291
        %v293 = vrot.slane %v268, %v292
        %v294 = vlaneseq
        %v295 = vshrl.u32 %v294, 7
        %v296 = vsub.s32 1, %v295
        %v297 = vrot.slane %v268, %v296
        %v300 = vmul.f32 %v267, %v293
        %v301 = vmul.f32 %v267, %v297
        %v302 = vadd.f32 %v280, %v300
        %v303 = vadd.f32 %v282, %v301
        %v304 = vsel %vm265, 1, 0
        %vm305 = vcmp.eq.s32.totalorder %v304, 1
        %v306 = vsel %vm305, %v287, %v302
        %v307 = vsel %vm305, %v288, %v303
        %308 = vst [vmem:[%s245] sm:$0xff] %v306
        %309 = vst [vmem:[%s245 + $0x8] sm:$0xff] %v307
        %s310 = sand.u32 %s129, 1
        %s311 = scalar_lea.sflag [#allocation4], %s310
        %s312 = sand.u32 %s129, 1
        %s313 = smul.addr %s312, 16
        %s314 = scalar_lea.vmem [#allocation7], %s313
        // Predicated region
        $region41: #{tpu_custom_call.1} parent=31 // pred_check
          %p315 = pneg %p139
        $region42: #{tpu_custom_call.1} parent=31 // pred_check_branch
          %317 = sbr.rel (%p315) target = $region44
        $region43: #{tpu_custom_call.1} parent=31 // pred_region
          %s318 = smul.u32 2, %s28
          %s320 = ssub.s32 256, 256
          %321 = vsyncadd %s311, %s320
          %s322 = smul.addr %s27, 2
          %s323 = sadd.s32 %s318, %s322
          %s324 = smul.addr %s26, 6
          %s325 = sadd.s32 %s323, %s324
          %s326 = smul.addr %s325, 128
          %s327 = scalar_lea.hbm %s3, %s326
          %s329 = sshll.u32 %s314, 4
          %s330 = int_to_ptr.vmem [resolvable:$true] %s329
          %332 = dma.vmem_to_hbm [thread:$0]  %s330, 256, %s327, %s311
        $region44: #{tpu_custom_call.1} parent=31 // pred_fallthru
          _
      $region32: #{tpu_custom_call.1} parent=5 // pred_fallthru
        _
      %p333 = scmp.le.s32.totalorder 2, %s16
      // Predicated region
      $region45: #{tpu_custom_call.1} parent=5 // pred_check
        %p334 = pneg %p333
      $region46: #{tpu_custom_call.1} parent=5 // pred_check_branch
        %336 = sbr.rel (%p334) target = $region48
      $region47: #{tpu_custom_call.1} parent=5 // pred_region
        %s337 = ssub.s32 %s16, 2
        // Predicated region
        $region49: #{tpu_custom_call.1} parent=47 // pred_check
          %p338 = pneg %p145
        $region50: #{tpu_custom_call.1} parent=47 // pred_check_branch
          %340 = sbr.rel (%p338) target = $region52
        $region51: #{tpu_custom_call.1} parent=47 // pred_region
          %s341 = sand.u32 %s130, 1
          %s342 = scalar_lea.sflag [#allocation4], %s341
          %s343 = sand.u32 %s130, 1
          %s344 = smul.addr %s343, 16
          %s345 = scalar_lea.vmem [#allocation7], %s344
          %346 = dma.done %s342, 256
        $region52: #{tpu_custom_call.1} parent=47 // pred_fallthru
          _
      $region48: #{tpu_custom_call.1} parent=5 // pred_fallthru
        _
    $region6: #{tpu_custom_call.1} parent=1 // loop_footer
      %s20 = sadd.s32 1, %s16
    $region7: #{tpu_custom_call.1} parent=1 // loop_footer_branch
      %15 = sbr.rel target = $region3
    $region8: #{tpu_custom_call.1} parent=1 // loop_exit
      _
    %347 = vsyncpa [#allocation3], 1
    %s348 = scalar_lea.sflag [#allocation3], 1
    %349 = vsyncpa %s348, 1
    %350 = vsyncpa [#allocation4], 1
    %s351 = scalar_lea.sflag [#allocation4], 1
    %352 = vsyncpa %s351, 1
    %353 = vsyncpa [#allocation5], 1
    %s354 = scalar_lea.sflag [#allocation5], 1
    %355 = vsyncpa %s354, 1

</llo_original>
